<compile_context>
chip_gen: v6e
topology: v6e:2x2x1
jax: 0.10.0
libtpu: 0.0.40
codegen_flags: <defaults>
</compile_context>

<pallas_src>
import functools

import jax
import jax.numpy as jnp
from jax.experimental import pallas as pl
from jax.experimental.pallas import tpu as pltpu


# --------------------------------------------------------------------------
# Kernels
# --------------------------------------------------------------------------
def _amf_g_single_pass_kernel(x_ref, r_ref, w1_ref, b1_ref, w2_ref, b2_ref,
                              o_ref, *, inv_hw):
    """One grid step processes a (Bn, C, HW) batch of whole images."""
    xa = x_ref[...] + r_ref[...]                                   # (Bn, C, HW)
    pooled = (jnp.sum(xa, axis=2) * inv_hw).T                      # (C, Bn)
    h = jnp.dot(w1_ref[...], pooled,
                preferred_element_type=jnp.float32) + b1_ref[...]  # (Ci, Bn)
    h = jnp.maximum(h, 0.0)
    g = jnp.dot(w2_ref[...], h,
                preferred_element_type=jnp.float32) + b2_ref[...]  # (C, Bn)
    gate = jax.nn.sigmoid(g).T                                     # (Bn, C)
    o_ref[...] = xa * gate[:, :, None]                             # lane-broadcast


def _amf_g_two_pass_kernel(x_ref, r_ref, w1_ref, b1_ref, w2_ref, b2_ref,
                           o_ref, acc_ref, gate_ref, *, T, inv_hw):
    # Grid = (N, 2*T).  Steps [0, T) accumulate the pooled sum over spatial
    # tiles (forward order); steps [T, 2*T) re-read the tiles in REVERSE
    # order and apply the sigmoid gate — the reverse order makes the input
    # block index at s==T equal the one at s==T-1, so Pallas skips that DMA
    # and the resident tile is reused.
    #
    # NOTE(output revisiting): o_ref's block index is held at T-1 for all of
    # pass 1 and only starts changing after the kernel first writes it at
    # s==T, so the uninitialized output buffer is never written back to HBM.
    # NOTE(trace order): at s==T the gate-compute body below is traced BEFORE
    # the apply body, so gate_ref is written before it is read.
    s = pl.program_id(1)
    xa = x_ref[0] + r_ref[0]                                       # (C, tile)

    @pl.when(s == 0)
    def _():
        acc_ref[...] = jnp.zeros_like(acc_ref)

    @pl.when(s < T)          # pass 1: accumulate pooled sum over spatial tiles
    def _():
        acc_ref[...] += jnp.sum(xa, axis=1, keepdims=True)

    @pl.when(s == T)         # pass-2 entry: compute the (C, 1) sigmoid gate once
    def _():
        pooled = acc_ref[...] * inv_hw
        h = jnp.dot(w1_ref[...], pooled,
                    preferred_element_type=jnp.float32) + b1_ref[...]
        h = jnp.maximum(h, 0.0)
        g = jnp.dot(w2_ref[...], h,
                    preferred_element_type=jnp.float32) + b2_ref[...]
        gate_ref[...] = jax.nn.sigmoid(g)

    @pl.when(s >= T)         # pass 2: apply gate tile-by-tile (lane-dense stores)
    def _():
        o_ref[0] = xa * gate_ref[...]


# --------------------------------------------------------------------------
# VMEM-budget policy (generation aware)
# --------------------------------------------------------------------------
_WEIGHT_SLOP = 1 << 20   # folded conv weights/biases + scratch + misc (generous)


def _vmem_capacity_bytes():
    """Physical VMEM per TensorCore; conservative fallback if unqueryable."""
    try:
        cap = int(pltpu.get_tpu_info().vmem_capacity_bytes)
        if cap > 0:
            return cap
    except Exception:
        pass
    return 64 << 20          # v7x per-core VMEM (the most restrictive generation)


def _vmem_limit_bytes(footprint, cap):
    """Explicit scoped-VMEM limit: footprint + headroom, capped below physical."""
    return int(min(max(footprint + (8 << 20), 32 << 20),
                   max(cap - (8 << 20), 24 << 20)))


def _pick_spatial_tile(HW, C, budget_bytes, tile_cap=None):
    """Largest multiple-of-128 divisor of HW whose double-buffered x/r/out
    tiles (6 * 4 * C * tile bytes) fit the budget."""
    if HW % 128 != 0:
        return None
    max_tile = max(128, budget_bytes // (6 * 4 * C))
    if tile_cap is not None:
        max_tile = min(max_tile, max(128, tile_cap))
    best = None
    for t in range(128, HW + 1, 128):
        if t <= max_tile and HW % t == 0:
            best = t
    return best


def _pick_batch(N, C, HW, budget_bytes):
    """Images per grid step: aim for >= ~2 MiB blocks (amortize per-step
    overhead, approach HBM roofline) while keeping the double-buffered
    x/r/out footprint inside the budget; Bn must divide N."""
    per_img = C * HW * 4
    target = max(1, (2 << 20) // per_img)
    target = min(target, max(1, budget_bytes // (6 * per_img)))
    target = min(target, N)
    for bn in range(target, 0, -1):
        if N % bn == 0:
            return bn
    return 1


# --------------------------------------------------------------------------
# pallas_call wrappers
# --------------------------------------------------------------------------
def amf_g_pallas(x, r, w1f, b1f, w2f, b2f, *, force_two_pass=False,
                 tile_cap=None):
    """x, r: (N, C, HW) f32; w1f (Ci, C), b1f (Ci, 1), w2f (C, Ci), b2f (C, 1)."""
    N, C, HW = x.shape
    Ci = w1f.shape[0]
    inv_hw = 1.0 / float(HW)

    cap = _vmem_capacity_bytes()
    # Prefer single pass (3 HBM slabs: read x, read r, write out) whenever the
    # double-buffered whole-image footprint fits ~3/4 of this generation's
    # VMEM; the two-pass path costs ~1.67x HBM traffic (x, r read twice).
    single_budget = (cap * 3) // 4
    per_image_fp = 6 * C * HW * 4                        # 3 arrays x 2 buffers

    if not force_two_pass and per_image_fp + _WEIGHT_SLOP <= single_budget:
        Bn = _pick_batch(N, C, HW, single_budget)
        footprint = 6 * Bn * C * HW * 4 + _WEIGHT_SLOP
        img_spec = pl.BlockSpec((Bn, C, HW), lambda n: (n, 0, 0))
        wspec = lambda shp: pl.BlockSpec(shp, lambda n: (0, 0))
        # TODO(synk): for N == 1 on v7x (2 TensorCores) a spatial split with a
        # cross-core pooled-sum combine would feed both cores; single-TC here.
        return pl.pallas_call(
            functools.partial(_amf_g_single_pass_kernel, inv_hw=inv_hw),
            out_shape=jax.ShapeDtypeStruct((N, C, HW), jnp.float32),
            grid_spec=pltpu.PrefetchScalarGridSpec(
                num_scalar_prefetch=0,
                grid=(N // Bn,),
                in_specs=[img_spec, img_spec,
                          wspec((Ci, C)), wspec((Ci, 1)),
                          wspec((C, Ci)), wspec((C, 1))],
                out_specs=img_spec,
            ),
            compiler_params=pltpu.CompilerParams(
                dimension_semantics=("parallel",),
                vmem_limit_bytes=_vmem_limit_bytes(footprint, cap)),
        )(x, r, w1f, b1f, w2f, b2f)

    # ---- two-pass tiled path: pass 1 pools, pass 2 gates, per spatial tile --
    tile_budget = min(24 << 20, cap // 2)
    tile = _pick_spatial_tile(HW, C, tile_budget, tile_cap)
    HW_work, pad = HW, 0
    xw, rw = x, r
    if tile is None:
        # HW has no usable multiple-of-128 divisor: zero-pad the spatial axis
        # (exact — zeros do not perturb the pooled sum since inv_hw uses the
        # true HW) and slice the pad off afterwards.  Costs one extra wrapper
        # copy of x/r but keeps lane-dense tiles on every generation.
        HW_work = ((HW + 127) // 128) * 128
        pad = HW_work - HW
        xw = jnp.pad(x, ((0, 0), (0, 0), (0, pad)))
        rw = jnp.pad(r, ((0, 0), (0, 0), (0, pad)))
        tile = _pick_spatial_tile(HW_work, C, tile_budget, tile_cap)

    T = HW_work // tile
    footprint = 6 * C * tile * 4 + _WEIGHT_SLOP
    # Pass 1 walks tiles 0..T-1; pass 2 walks them back T-1..0 so the tile
    # resident at the pass boundary is reused without a re-DMA.
    in_spec = pl.BlockSpec(
        (1, C, tile), lambda n, s: (n, 0, jnp.where(s < T, s, 2 * T - 1 - s)))
    out_spec = pl.BlockSpec(
        (1, C, tile),
        lambda n, s: (n, 0, jnp.where(s < T, T - 1, 2 * T - 1 - s)))
    wspec = lambda shp: pl.BlockSpec(shp, lambda n, s: (0, 0))
    out = pl.pallas_call(
        functools.partial(_amf_g_two_pass_kernel, T=T, inv_hw=inv_hw),
        out_shape=jax.ShapeDtypeStruct((N, C, HW_work), jnp.float32),
        grid_spec=pltpu.PrefetchScalarGridSpec(
            num_scalar_prefetch=0,
            grid=(N, 2 * T),
            in_specs=[in_spec, in_spec,
                      wspec((Ci, C)), wspec((Ci, 1)),
                      wspec((C, Ci)), wspec((C, 1))],
            out_specs=out_spec,
            scratch_shapes=[pltpu.VMEM((C, 1), jnp.float32),   # pooled-sum acc
                            pltpu.VMEM((C, 1), jnp.float32)],  # sigmoid gate
        ),
        compiler_params=pltpu.CompilerParams(
            dimension_semantics=("parallel", "arbitrary"),
            vmem_limit_bytes=_vmem_limit_bytes(footprint, cap)),
    )(xw, rw, w1f, b1f, w2f, b2f)
    if pad:
        out = out[:, :, :HW]
    return out


def amf_g_forward(x_nchw, res_nchw, params, *, eps=1e-5, force_two_pass=False,
                  tile_cap=None):
    """NCHW wrapper matching the PyTorch module's interface (eval-mode BN)."""
    N, C, H, W = x_nchw.shape
    HW = H * W

    # (N, C, H, W) -> (N, C, HW) is a pure reshape: no transpose in the wrapper.
    x = x_nchw.reshape(N, C, HW)
    r = res_nchw.reshape(N, C, HW)

    # Fold eval-mode BatchNorm (running stats) + conv bias into the conv:
    #   BN(W p + b) = (scale * W) p + (beta + scale * (b - mean)).
    def fold(w, b, gamma, beta, mean, var):
        scale = gamma / jnp.sqrt(var + eps)                     # (Cout,)
        return w * scale[:, None], (beta + scale * (b - mean))[:, None]

    w1f, b1f = fold(params["w1"], params["b1"], params["bn1_gamma"],
                    params["bn1_beta"], params["bn1_mean"], params["bn1_var"])
    w2f, b2f = fold(params["w2"], params["b2"], params["bn2_gamma"],
                    params["bn2_beta"], params["bn2_mean"], params["bn2_var"])

    out = amf_g_pallas(x, r, w1f, b1f, w2f, b2f,
                       force_two_pass=force_two_pass, tile_cap=tile_cap)
    return out.reshape(N, C, H, W)


# --------------------------------------------------------------------------
# Parameters + pure-JAX reference (mirrors the PyTorch module, eval-mode BN)
# --------------------------------------------------------------------------
def make_params(key, channels=64, r=2):
    Ci = channels // r
    ks = jax.random.split(key, 8)
    f32 = jnp.float32
    return {
        # Conv2d(channels, Ci, 1) weight squeezed to (Ci, C), bias (Ci,)
        "w1": 0.1 * jax.random.normal(ks[0], (Ci, channels), f32),
        "b1": 0.1 * jax.random.normal(ks[1], (Ci,), f32),
        # BatchNorm2d(Ci), eval-mode running stats
        "bn1_gamma": 1.0 + 0.1 * jax.random.normal(ks[2], (Ci,), f32),
        "bn1_beta": 0.1 * jax.random.normal(ks[3], (Ci,), f32),
        "bn1_mean": 0.05 * jax.random.normal(ks[4], (Ci,), f32),
        "bn1_var": jnp.ones((Ci,), f32) * 1.2,
        # Conv2d(Ci, channels, 1) weight (C, Ci), bias (C,)
        "w2": 0.1 * jax.random.normal(ks[5], (channels, Ci), f32),
        "b2": 0.1 * jax.random.normal(ks[6], (channels,), f32),
        # BatchNorm2d(channels)
        "bn2_gamma": 1.0 + 0.1 * jax.random.normal(ks[7], (channels,), f32),
        "bn2_beta": jnp.zeros((channels,), f32),
        "bn2_mean": jnp.zeros((channels,), f32),
        "bn2_var": jnp.ones((channels,), f32),
    }


def amf_g_reference(x_nchw, res_nchw, params, eps=1e-5):
    xa = x_nchw + res_nchw
    pooled = jnp.mean(xa, axis=(2, 3))                                   # (N, C)
    h = pooled @ params["w1"].T + params["b1"]
    h = (h - params["bn1_mean"]) / jnp.sqrt(params["bn1_var"] + eps)
    h = h * params["bn1_gamma"] + params["bn1_beta"]
    h = jnp.maximum(h, 0.0)
    g = h @ params["w2"].T + params["b2"]
    g = (g - params["bn2_mean"]) / jnp.sqrt(params["bn2_var"] + eps)
    g = g * params["bn2_gamma"] + params["bn2_beta"]
    xs = jax.nn.sigmoid(g)[:, :, None, None]
    return xa * xs


if __name__ == "__main__":
    N, C, H, W = 2, 64, 16, 16
    key = jax.random.PRNGKey(0)
    kx, kr, kp = jax.random.split(key, 3)
    x = jax.random.normal(kx, (N, C, H, W), jnp.float32)
    residual = jax.random.normal(kr, (N, C, H, W), jnp.float32)
    params = make_params(kp, channels=C, r=2)

    ref = amf_g_reference(x, residual, params)

    # 1) Default policy: single-pass batched path (Bn images per grid step).
    out1 = jax.block_until_ready(amf_g_forward(x, residual, params))
    assert out1.shape == (N, C, H, W)
    assert jnp.max(jnp.abs(out1 - ref)) < 1e-4, "single-pass mismatch"

    # 2) Two-pass tiled path (forced, tile capped so T > 1): exercises the
    #    pooled-sum accumulator and the reverse-order tile reuse at s == T.
    out2 = jax.block_until_ready(
        amf_g_forward(x, residual, params, force_two_pass=True, tile_cap=128))
    assert jnp.max(jnp.abs(out2 - ref)) < 1e-4, "two-pass mismatch"

    # 3) Awkward spatial size (HW not a multiple of 128) on the two-pass path:
    #    exercises the zero-padding fallback and the slice-back.
    x3 = jax.random.normal(kx, (N, C, 12, 12), jnp.float32)
    r3 = jax.random.normal(kr, (N, C, 12, 12), jnp.float32)
    ref3 = amf_g_reference(x3, r3, params)
    out3 = jax.block_until_ready(
        amf_g_forward(x3, r3, params, force_two_pass=True, tile_cap=128))
    assert jnp.max(jnp.abs(out3 - ref3)) < 1e-4, "padded two-pass mismatch"

    print("KERNEL_OK")
</pallas_src>

<mosaic_0001>
module attributes {stable_mosaic.version = 11 : i64} {
  func.func @_amf_g_single_pass_kernel(%arg0: i32, %arg1: memref<2x64x256xf32, #tpu.memory_space<vmem>>, %arg2: memref<2x64x256xf32, #tpu.memory_space<vmem>>, %arg3: memref<32x64xf32, #tpu.memory_space<vmem>>, %arg4: memref<32x1xf32, #tpu.memory_space<vmem>>, %arg5: memref<64x32xf32, #tpu.memory_space<vmem>>, %arg6: memref<64x1xf32, #tpu.memory_space<vmem>>, %arg7: memref<2x64x256xf32, #tpu.memory_space<vmem>>) attributes {dimension_semantics = [#tpu.dimension_semantics<parallel>], iteration_bounds = array<i64: 1>, scalar_prefetch = 0 : i64, scratch_operands = 0 : i64, tpu.core_type = #tpu.core_type<tc>, window_params = [{transform_indices = @transform_0, window_bounds = array<i64: 2, 64, 256>}, {transform_indices = @transform_1, window_bounds = array<i64: 2, 64, 256>}, {pipeline_mode = #tpu.pipeline_mode<synchronous>, transform_indices = @transform_2, window_bounds = array<i64: 32, 64>}, {pipeline_mode = #tpu.pipeline_mode<synchronous>, transform_indices = @transform_3, window_bounds = array<i64: 32, 1>}, {pipeline_mode = #tpu.pipeline_mode<synchronous>, transform_indices = @transform_4, window_bounds = array<i64: 64, 32>}, {pipeline_mode = #tpu.pipeline_mode<synchronous>, transform_indices = @transform_5, window_bounds = array<i64: 64, 1>}, {transform_indices = @transform_6, window_bounds = array<i64: 2, 64, 256>}]} {
    %c0 = arith.constant 0 : index
    %c0_0 = arith.constant 0 : index
    %c0_1 = arith.constant 0 : index
    %0 = vector.load %arg1[%c0, %c0_0, %c0_1] : memref<2x64x256xf32, #tpu.memory_space<vmem>>, vector<2x64x256xf32>
    %c0_2 = arith.constant 0 : index
    %c0_3 = arith.constant 0 : index
    %c0_4 = arith.constant 0 : index
    %1 = vector.load %arg2[%c0_2, %c0_3, %c0_4] : memref<2x64x256xf32, #tpu.memory_space<vmem>>, vector<2x64x256xf32>
    %2 = arith.addf %0, %1 : vector<2x64x256xf32>
    %cst = arith.constant dense<0.000000e+00> : vector<2x64xf32>
    %3 = vector.multi_reduction <add>, %2, %cst [2] : vector<2x64x256xf32> to vector<2x64xf32>
    %cst_5 = arith.constant 3.906250e-03 : f32
    %4 = vector.broadcast %cst_5 : f32 to vector<2x64xf32>
    %5 = arith.mulf %3, %4 : vector<2x64xf32>
    %6 = tpu.transpose %5, [1, 0] : vector<2x64xf32> -> vector<64x2xf32>
    %c0_6 = arith.constant 0 : index
    %c0_7 = arith.constant 0 : index
    %7 = vector.load %arg3[%c0_6, %c0_7] : memref<32x64xf32, #tpu.memory_space<vmem>>, vector<32x64xf32>
    %cst_8 = arith.constant dense<0.000000e+00> : vector<32x2xf32>
    %8 = tpu.matmul %7, %6, %cst_8 {dimension_numbers = #tpu.dot_dimension_numbers<[1], [0], [0], [1], [0, 0, 1, 1], [], []>} : vector<32x64xf32>, vector<64x2xf32>, vector<32x2xf32> -> vector<32x2xf32>
    %c0_9 = arith.constant 0 : index
    %c0_10 = arith.constant 0 : index
    %9 = vector.load %arg4[%c0_9, %c0_10] : memref<32x1xf32, #tpu.memory_space<vmem>>, vector<32x1xf32>
    %10 = vector.broadcast %9 : vector<32x1xf32> to vector<32x2xf32>
    %11 = arith.addf %8, %10 : vector<32x2xf32>
    %cst_11 = arith.constant 0.000000e+00 : f32
    %12 = vector.broadcast %cst_11 : f32 to vector<32x2xf32>
    %13 = arith.maximumf %11, %12 : vector<32x2xf32>
    %c0_12 = arith.constant 0 : index
    %c0_13 = arith.constant 0 : index
    %14 = vector.load %arg5[%c0_12, %c0_13] : memref<64x32xf32, #tpu.memory_space<vmem>>, vector<64x32xf32>
    %cst_14 = arith.constant dense<0.000000e+00> : vector<64x2xf32>
    %15 = tpu.matmul %14, %13, %cst_14 {dimension_numbers = #tpu.dot_dimension_numbers<[1], [0], [0], [1], [0, 0, 1, 1], [], []>} : vector<64x32xf32>, vector<32x2xf32>, vector<64x2xf32> -> vector<64x2xf32>
    %c0_15 = arith.constant 0 : index
    %c0_16 = arith.constant 0 : index
    %16 = vector.load %arg6[%c0_15, %c0_16] : memref<64x1xf32, #tpu.memory_space<vmem>>, vector<64x1xf32>
    %17 = vector.broadcast %16 : vector<64x1xf32> to vector<64x2xf32>
    %18 = arith.addf %15, %17 : vector<64x2xf32>
    %19 = arith.negf %18 : vector<64x2xf32>
    %20 = math.exp %19 : vector<64x2xf32>
    %cst_17 = arith.constant 1.000000e+00 : f32
    %21 = vector.broadcast %cst_17 : f32 to vector<64x2xf32>
    %22 = arith.addf %21, %20 : vector<64x2xf32>
    %23 = arith.divf %21, %22 : vector<64x2xf32>
    %24 = tpu.transpose %23, [1, 0] : vector<64x2xf32> -> vector<2x64xf32>
    %25 = vector.shape_cast %24 : vector<2x64xf32> to vector<2x64x1xf32>
    %26 = vector.broadcast %25 : vector<2x64x1xf32> to vector<2x64x256xf32>
    %27 = arith.mulf %2, %26 : vector<2x64x256xf32>
    %c0_18 = arith.constant 0 : index
    %c0_19 = arith.constant 0 : index
    %c0_20 = arith.constant 0 : index
    %28 = vector.load %arg7[%c0_18, %c0_19, %c0_20] : memref<2x64x256xf32, #tpu.memory_space<vmem>>, vector<2x64x256xf32>
    tpu.vector_store %arg7[%c0_18, %c0_19, %c0_20], %27 {strides = array<i32>} : memref<2x64x256xf32, #tpu.memory_space<vmem>>, vector<2x64x256xf32>,
    return
  }
  func.func @transform_0(%arg0: i32) -> (i32, i32, i32) {
    %c0_i32 = arith.constant 0 : i32
    %c0_i32_0 = arith.constant 0 : i32
    %c0_i32_1 = arith.constant 0 : i32
    return %arg0, %c0_i32, %c0_i32_0 : i32, i32, i32
  }
  func.func @transform_1(%arg0: i32) -> (i32, i32, i32) {
    %c0_i32 = arith.constant 0 : i32
    %c0_i32_0 = arith.constant 0 : i32
    %c0_i32_1 = arith.constant 0 : i32
    return %arg0, %c0_i32, %c0_i32_0 : i32, i32, i32
  }
  func.func @transform_2(%arg0: i32) -> (i32, i32) {
    %c0_i32 = arith.constant 0 : i32
    %c0_i32_0 = arith.constant 0 : i32
    %c0_i32_1 = arith.constant 0 : i32
    return %c0_i32, %c0_i32_0 : i32, i32
  }
  func.func @transform_3(%arg0: i32) -> (i32, i32) {
    %c0_i32 = arith.constant 0 : i32
    %c0_i32_0 = arith.constant 0 : i32
    %c0_i32_1 = arith.constant 0 : i32
    return %c0_i32, %c0_i32_0 : i32, i32
  }
  func.func @transform_4(%arg0: i32) -> (i32, i32) {
    %c0_i32 = arith.constant 0 : i32
    %c0_i32_0 = arith.constant 0 : i32
    %c0_i32_1 = arith.constant 0 : i32
    return %c0_i32, %c0_i32_0 : i32, i32
  }
  func.func @transform_5(%arg0: i32) -> (i32, i32) {
    %c0_i32 = arith.constant 0 : i32
    %c0_i32_0 = arith.constant 0 : i32
    %c0_i32_1 = arith.constant 0 : i32
    return %c0_i32, %c0_i32_0 : i32, i32
  }
  func.func @transform_6(%arg0: i32) -> (i32, i32, i32) {
    %c0_i32 = arith.constant 0 : i32
    %c0_i32_0 = arith.constant 0 : i32
    %c0_i32_1 = arith.constant 0 : i32
    return %arg0, %c0_i32, %c0_i32_0 : i32, i32, i32
  }
}

</mosaic_0001>

<llo_original>
// kernel: tpu_custom_call.1
$region0: #{tpu_custom_call.1}
  #allocation0 [shape = 'u32[]', space=smem, size = 0x4, offset = 0x4, fixed_abs, tag = 'smem constant byte address 0x4 - core index']
  #allocation1 [shape = 'u32[144,128]{1,0:T(1,128)}', space=vmem, size = 0x12000, scoped, tag = 'internal scratch']
  %s0 = inlined_call_operand.hbm [shape: f32[2,64,256], index: 0, kind: input, shape index: {}]
  %s1 = inlined_call_operand.hbm [shape: f32[2,64,256], index: 1, kind: input, shape index: {}]
  %s2 = inlined_call_operand.vmem [shape: f32[32,64], index: 2, kind: input, shape index: {}]
  %s3 = inlined_call_operand.vmem [shape: f32[32,1], index: 3, kind: input, shape index: {}]
  %s4 = inlined_call_operand.vmem [shape: f32[64,32], index: 4, kind: input, shape index: {}]
  %s5 = inlined_call_operand.vmem [shape: f32[64,1], index: 5, kind: input, shape index: {}]
  %s6 = inlined_call_operand.hbm [shape: f32[2,64,256], index: 6, kind: output, shape index: {}]
  %s7 = sld [smem:[#allocation0]]
  $region42: #{tpu_custom_call.1} parent=0
    _
  %s9 = ssub.s32 1, %s7
  %s10 = scalar_select 0, %s9, %s7
  $region1: #{tpu_custom_call.1} parent=0
    #allocation2 [shape = 'u8[131072]{0}', space=vmem, size = 0x20000, scoped, tag = 'input window, operand 0, single buffered']
    #allocation3 [shape = 's32[1]{0}', space=sflag, size = 0x4, scoped, tag = 'scoped memory for tpu_custom_call.1']
    #allocation4 [shape = 's32[1]{0}', space=sflag, size = 0x4, scoped, tag = 'scoped memory for tpu_custom_call.1']
    #allocation5 [shape = 'u8[131072]{0}', space=vmem, size = 0x20000, scoped, tag = 'input window, operand 1, single buffered']
    #allocation6 [shape = 's32[1]{0}', space=sflag, size = 0x4, scoped, tag = 'scoped memory for tpu_custom_call.1']
    #allocation7 [shape = 'u8[131072]{0}', space=vmem, size = 0x20000, scoped, tag = 'output window, operand 0, single buffered']
    %11 = vsyncpa [#allocation3], 0
    %12 = vsyncpa [#allocation6], 0
    %13 = vsyncpa [#allocation4], 0
    // Predicated region
    $region2: #{tpu_custom_call.1} parent=1 // pred_check
      _
    $region3: #{tpu_custom_call.1} parent=1 // pred_check_branch
      %15 = sbr.rel (0) target = $region5
    $region4: #{tpu_custom_call.1} parent=1 // pred_region
      %s17 = ssub.s32 4096, 4096
      %18 = vsyncadd [#allocation3], %s17
      %s19 = sshll.u32 [#allocation2], 4
      %s20 = int_to_ptr.vmem [resolvable:$true] %s19
      %25 = dma.hbm_to_vmem [thread:$0]  %s0, 4096, %s20, [#allocation3], 256, 256, 16
    $region5: #{tpu_custom_call.1} parent=1 // pred_fallthru
      _
    // Predicated region
    $region6: #{tpu_custom_call.1} parent=1 // pred_check
      _
    $region7: #{tpu_custom_call.1} parent=1 // pred_check_branch
      %27 = sbr.rel (0) target = $region9
    $region8: #{tpu_custom_call.1} parent=1 // pred_region
      %s29 = ssub.s32 4096, 4096
      %30 = vsyncadd [#allocation6], %s29
      %s31 = sshll.u32 [#allocation5], 4
      %s32 = int_to_ptr.vmem [resolvable:$true] %s31
      %37 = dma.hbm_to_vmem [thread:$0]  %s1, 4096, %s32, [#allocation6], 256, 256, 16
    $region9: #{tpu_custom_call.1} parent=1 // pred_fallthru
      _
    // Predicated region
    $region10: #{tpu_custom_call.1} parent=1 // pred_check
      _
    $region11: #{tpu_custom_call.1} parent=1 // pred_check_branch
      %39 = sbr.rel (0) target = $region13
    $region12: #{tpu_custom_call.1} parent=1 // pred_region
      _
    $region13: #{tpu_custom_call.1} parent=1 // pred_fallthru
      _
    // Predicated region
    $region14: #{tpu_custom_call.1} parent=1 // pred_check
      _
    $region15: #{tpu_custom_call.1} parent=1 // pred_check_branch
      %41 = sbr.rel (0) target = $region17
    $region16: #{tpu_custom_call.1} parent=1 // pred_region
      _
    $region17: #{tpu_custom_call.1} parent=1 // pred_fallthru
      _
    // Predicated region
    $region18: #{tpu_custom_call.1} parent=1 // pred_check
      _
    $region19: #{tpu_custom_call.1} parent=1 // pred_check_branch
      %43 = sbr.rel (0) target = $region21
    $region20: #{tpu_custom_call.1} parent=1 // pred_region
      _
    $region21: #{tpu_custom_call.1} parent=1 // pred_fallthru
      _
    // Predicated region
    $region22: #{tpu_custom_call.1} parent=1 // pred_check
      _
    $region23: #{tpu_custom_call.1} parent=1 // pred_check_branch
      %45 = sbr.rel (0) target = $region25
    $region24: #{tpu_custom_call.1} parent=1 // pred_region
      _
    $region25: #{tpu_custom_call.1} parent=1 // pred_fallthru
      _
    // Predicated region
    $region26: #{tpu_custom_call.1} parent=1 // pred_check
      _
    $region27: #{tpu_custom_call.1} parent=1 // pred_check_branch
      %47 = sbr.rel (0) target = $region29
    $region28: #{tpu_custom_call.1} parent=1 // pred_region
      %48 = dma.done [#allocation3], 4096
    $region29: #{tpu_custom_call.1} parent=1 // pred_fallthru
      _
    // Predicated region
    $region30: #{tpu_custom_call.1} parent=1 // pred_check
      _
    $region31: #{tpu_custom_call.1} parent=1 // pred_check_branch
      %50 = sbr.rel (0) target = $region33
    $region32: #{tpu_custom_call.1} parent=1 // pred_region
      %51 = dma.done [#allocation6], 4096
    $region33: #{tpu_custom_call.1} parent=1 // pred_fallthru
      _
    %v52 = vld [vmem:[#allocation2] sm:$0xff]
    %v53 = vld [vmem:[#allocation2 + $0x8] sm:$0xff]
    %v54 = vld [vmem:[#allocation2 + $0x10] sm:$0xff]
    %v55 = vld [vmem:[#allocation2 + $0x18] sm:$0xff]
    %v56 = vld [vmem:[#allocation2 + $0x20] sm:$0xff]
    %v57 = vld [vmem:[#allocation2 + $0x28] sm:$0xff]
    %v58 = vld [vmem:[#allocation2 + $0x30] sm:$0xff]
    %v59 = vld [vmem:[#allocation2 + $0x38] sm:$0xff]
    %v60 = vld [vmem:[#allocation2 + $0x40] sm:$0xff]
    %v61 = vld [vmem:[#allocation2 + $0x48] sm:$0xff]
    %v62 = vld [vmem:[#allocation2 + $0x50] sm:$0xff]
    %v63 = vld [vmem:[#allocation2 + $0x58] sm:$0xff]
    %v64 = vld [vmem:[#allocation2 + $0x60] sm:$0xff]
    %v65 = vld [vmem:[#allocation2 + $0x68] sm:$0xff]
    %v66 = vld [vmem:[#allocation2 + $0x70] sm:$0xff]
    %v67 = vld [vmem:[#allocation2 + $0x78] sm:$0xff]
    %v68 = vld [vmem:[#allocation2 + $0x80] sm:$0xff]
    %v69 = vld [vmem:[#allocation2 + $0x88] sm:$0xff]
    %v70 = vld [vmem:[#allocation2 + $0x90] sm:$0xff]
    %v71 = vld [vmem:[#allocation2 + $0x98] sm:$0xff]
    %v72 = vld [vmem:[#allocation2 + $0xa0] sm:$0xff]
    %v73 = vld [vmem:[#allocation2 + $0xa8] sm:$0xff]
    %v74 = vld [vmem:[#allocation2 + $0xb0] sm:$0xff]
    %v75 = vld [vmem:[#allocation2 + $0xb8] sm:$0xff]
    %v76 = vld [vmem:[#allocation2 + $0xc0] sm:$0xff]
    %v77 = vld [vmem:[#allocation2 + $0xc8] sm:$0xff]
    %v78 = vld [vmem:[#allocation2 + $0xd0] sm:$0xff]
    %v79 = vld [vmem:[#allocation2 + $0xd8] sm:$0xff]
    %v80 = vld [vmem:[#allocation2 + $0xe0] sm:$0xff]
    %v81 = vld [vmem:[#allocation2 + $0xe8] sm:$0xff]
    %v82 = vld [vmem:[#allocation2 + $0xf0] sm:$0xff]
    %v83 = vld [vmem:[#allocation2 + $0xf8] sm:$0xff]
    %v84 = vld [vmem:[#allocation5] sm:$0xff]
    %v85 = vld [vmem:[#allocation5 + $0x8] sm:$0xff]
    %v86 = vld [vmem:[#allocation5 + $0x10] sm:$0xff]
    %v87 = vld [vmem:[#allocation5 + $0x18] sm:$0xff]
    %v88 = vld [vmem:[#allocation5 + $0x20] sm:$0xff]
    %v89 = vld [vmem:[#allocation5 + $0x28] sm:$0xff]
    %v90 = vld [vmem:[#allocation5 + $0x30] sm:$0xff]
    %v91 = vld [vmem:[#allocation5 + $0x38] sm:$0xff]
    %v92 = vld [vmem:[#allocation5 + $0x40] sm:$0xff]
    %v93 = vld [vmem:[#allocation5 + $0x48] sm:$0xff]
    %v94 = vld [vmem:[#allocation5 + $0x50] sm:$0xff]
    %v95 = vld [vmem:[#allocation5 + $0x58] sm:$0xff]
    %v96 = vld [vmem:[#allocation5 + $0x60] sm:$0xff]
    %v97 = vld [vmem:[#allocation5 + $0x68] sm:$0xff]
    %v98 = vld [vmem:[#allocation5 + $0x70] sm:$0xff]
    %v99 = vld [vmem:[#allocation5 + $0x78] sm:$0xff]
    %v100 = vld [vmem:[#allocation5 + $0x80] sm:$0xff]
    %v101 = vld [vmem:[#allocation5 + $0x88] sm:$0xff]
    %v102 = vld [vmem:[#allocation5 + $0x90] sm:$0xff]
    %v103 = vld [vmem:[#allocation5 + $0x98] sm:$0xff]
    %v104 = vld [vmem:[#allocation5 + $0xa0] sm:$0xff]
    %v105 = vld [vmem:[#allocation5 + $0xa8] sm:$0xff]
    %v106 = vld [vmem:[#allocation5 + $0xb0] sm:$0xff]
    %v107 = vld [vmem:[#allocation5 + $0xb8] sm:$0xff]
    %v108 = vld [vmem:[#allocation5 + $0xc0] sm:$0xff]
    %v109 = vld [vmem:[#allocation5 + $0xc8] sm:$0xff]
    %v110 = vld [vmem:[#allocation5 + $0xd0] sm:$0xff]
    %v111 = vld [vmem:[#allocation5 + $0xd8] sm:$0xff]
    %v112 = vld [vmem:[#allocation5 + $0xe0] sm:$0xff]
    %v113 = vld [vmem:[#allocation5 + $0xe8] sm:$0xff]
    %v114 = vld [vmem:[#allocation5 + $0xf0] sm:$0xff]
    %v115 = vld [vmem:[#allocation5 + $0xf8] sm:$0xff]
    %v116 = vadd.f32 %v52, %v84
    %v117 = vadd.f32 %v53, %v85
    %v118 = vadd.f32 %v54, %v86
    %v119 = vadd.f32 %v55, %v87
    %v120 = vadd.f32 %v56, %v88
    %v121 = vadd.f32 %v57, %v89
    %v122 = vadd.f32 %v58, %v90
    %v123 = vadd.f32 %v59, %v91
    %v124 = vadd.f32 %v60, %v92
    %v125 = vadd.f32 %v61, %v93
    %v126 = vadd.f32 %v62, %v94
    %v127 = vadd.f32 %v63, %v95
    %v128 = vadd.f32 %v64, %v96
    %v129 = vadd.f32 %v65, %v97
    %v130 = vadd.f32 %v66, %v98
    %v131 = vadd.f32 %v67, %v99
    %v132 = vadd.f32 %v68, %v100
    %v133 = vadd.f32 %v69, %v101
    %v134 = vadd.f32 %v70, %v102
    %v135 = vadd.f32 %v71, %v103
    %v136 = vadd.f32 %v72, %v104
    %v137 = vadd.f32 %v73, %v105
    %v138 = vadd.f32 %v74, %v106
    %v139 = vadd.f32 %v75, %v107
    %v140 = vadd.f32 %v76, %v108
    %v141 = vadd.f32 %v77, %v109
    %v142 = vadd.f32 %v78, %v110
    %v143 = vadd.f32 %v79, %v111
    %v144 = vadd.f32 %v80, %v112
    %v145 = vadd.f32 %v81, %v113
    %v146 = vadd.f32 %v82, %v114
    %v147 = vadd.f32 %v83, %v115
    %v148 = vadd.f32 %v116, %v117
    %149 = vadd.xlane.f32.xlu0 %v148
    %v150 = vpop.xlane.xlu0 %149
    %v151 = vadd.f32 %v118, %v119
    %152 = vadd.xlane.f32.xlu0 %v151
    %v153 = vpop.xlane.xlu0 %152
    %v154 = vadd.f32 %v120, %v121
    %155 = vadd.xlane.f32.xlu0 %v154
    %v156 = vpop.xlane.xlu0 %155
    %v157 = vadd.f32 %v122, %v123
    %158 = vadd.xlane.f32.xlu0 %v157
    %v159 = vpop.xlane.xlu0 %158
    %v160 = vadd.f32 %v124, %v125
    %161 = vadd.xlane.f32.xlu0 %v160
    %v162 = vpop.xlane.xlu0 %161
    %v163 = vadd.f32 %v126, %v127
    %164 = vadd.xlane.f32.xlu0 %v163
    %v165 = vpop.xlane.xlu0 %164
    %v166 = vadd.f32 %v128, %v129
    %167 = vadd.xlane.f32.xlu0 %v166
    %v168 = vpop.xlane.xlu0 %167
    %v169 = vadd.f32 %v130, %v131
    %170 = vadd.xlane.f32.xlu0 %v169
    %v171 = vpop.xlane.xlu0 %170
    %v172 = vadd.f32 %v132, %v133
    %173 = vadd.xlane.f32.xlu0 %v172
    %v174 = vpop.xlane.xlu0 %173
    %v175 = vadd.f32 %v134, %v135
    %176 = vadd.xlane.f32.xlu0 %v175
    %v177 = vpop.xlane.xlu0 %176
    %v178 = vadd.f32 %v136, %v137
    %179 = vadd.xlane.f32.xlu0 %v178
    %v180 = vpop.xlane.xlu0 %179
    %v181 = vadd.f32 %v138, %v139
    %182 = vadd.xlane.f32.xlu0 %v181
    %v183 = vpop.xlane.xlu0 %182
    %v184 = vadd.f32 %v140, %v141
    %185 = vadd.xlane.f32.xlu0 %v184
    %v186 = vpop.xlane.xlu0 %185
    %v187 = vadd.f32 %v142, %v143
    %188 = vadd.xlane.f32.xlu0 %v187
    %v189 = vpop.xlane.xlu0 %188
    %v190 = vadd.f32 %v144, %v145
    %191 = vadd.xlane.f32.xlu0 %v190
    %v192 = vpop.xlane.xlu0 %191
    %v193 = vadd.f32 %v146, %v147
    %194 = vadd.xlane.f32.xlu0 %v193
    %v195 = vpop.xlane.xlu0 %194
    %v196 = vmul.f32 %v150, 0.00390625
    %v197 = vmul.f32 %v153, 0.00390625
    %v198 = vmul.f32 %v156, 0.00390625
    %v199 = vmul.f32 %v159, 0.00390625
    %v200 = vmul.f32 %v162, 0.00390625
    %v201 = vmul.f32 %v165, 0.00390625
    %v202 = vmul.f32 %v168, 0.00390625
    %v203 = vmul.f32 %v171, 0.00390625
    %v204 = vmul.f32 %v174, 0.00390625
    %v205 = vmul.f32 %v177, 0.00390625
    %v206 = vmul.f32 %v180, 0.00390625
    %v207 = vmul.f32 %v183, 0.00390625
    %v208 = vmul.f32 %v186, 0.00390625
    %v209 = vmul.f32 %v189, 0.00390625
    %v210 = vmul.f32 %v192, 0.00390625
    %v211 = vmul.f32 %v195, 0.00390625
    %v212 = vld [vmem:[%s2] sm:$0xff]
    %v213 = vld [vmem:[%s2 + $0x8] sm:$0xff]
    %v214 = vld [vmem:[%s2 + $0x10] sm:$0xff]
    %v215 = vld [vmem:[%s2 + $0x18] sm:$0xff]
    %v216 = vld [vmem:[%s3] sm:$0xff]
    %v217 = vld [vmem:[%s3 + $0x8] sm:$0xff]
    %v218 = vld [vmem:[%s3 + $0x10] sm:$0xff]
    %v219 = vld [vmem:[%s3 + $0x18] sm:$0xff]
    %221 = vset.pattern.permute.xlu0 0
    %222 = vperm.xlu0 %221, %v216
    %v223 = vpop.permute.xlu0 %222
    %226 = vset.pattern.permute.xlu0 0
    %227 = vperm.xlu0 %226, %v217
    %v228 = vpop.permute.xlu0 %227
    %231 = vset.pattern.permute.xlu0 0
    %232 = vperm.xlu0 %231, %v218
    %v233 = vpop.permute.xlu0 %232
    %236 = vset.pattern.permute.xlu0 0
    %237 = vperm.xlu0 %236, %v219
    %v238 = vpop.permute.xlu0 %237
    %v256 = vlaneseq
    %v257 = vand.u32 %v256, 127
    %v258 = vlaneseq
    %v259 = vshrl.u32 %v258, 7
    %v260 = vsub.s32 %v257, %v259
    %v261 = vrot.slane %v196, %v260
    %v262 = vadd.s32 %v257, 4294967288
    %v263 = vlaneseq
    %v264 = vshrl.u32 %v263, 7
    %v265 = vsub.s32 %v262, %v264
    %v266 = vrot.slane %v197, %v265
    %vm267 = vcmask 130112
    %v268 = vsel %vm267, %v266, %v261
    %v269 = vadd.s32 %v257, 4294967280
    %v270 = vlaneseq
    %v271 = vshrl.u32 %v270, 7
    %v272 = vsub.s32 %v269, %v271
    %v273 = vrot.slane %v198, %v272
    %vm274 = vcmask 195712
    %v275 = vsel %vm274, %v273, %v268
    %v276 = vadd.s32 %v257, 4294967272
    %v277 = vlaneseq
    %v278 = vshrl.u32 %v277, 7
    %v279 = vsub.s32 %v276, %v278
    %v280 = vrot.slane %v199, %v279
    %vm281 = vcmask 261312
    %v282 = vsel %vm281, %v280, %v275
    %v283 = vadd.s32 %v257, 4294967264
    %v284 = vlaneseq
    %v285 = vshrl.u32 %v284, 7
    %v286 = vsub.s32 %v283, %v285
    %v287 = vrot.slane %v200, %v286
    %vm288 = vcmask 326912
    %v289 = vsel %vm288, %v287, %v282
    %v290 = vadd.s32 %v257, 4294967256
    %v291 = vlaneseq
    %v292 = vshrl.u32 %v291, 7
    %v293 = vsub.s32 %v290, %v292
    %v294 = vrot.slane %v201, %v293
    %vm295 = vcmask 392512
    %v296 = vsel %vm295, %v294, %v289
    %v297 = vadd.s32 %v257, 4294967248
    %v298 = vlaneseq
    %v299 = vshrl.u32 %v298, 7
    %v300 = vsub.s32 %v297, %v299
    %v301 = vrot.slane %v202, %v300
    %vm302 = vcmask 458112
    %v303 = vsel %vm302, %v301, %v296
    %v304 = vadd.s32 %v257, 4294967240
    %v305 = vlaneseq
    %v306 = vshrl.u32 %v305, 7
    %v307 = vsub.s32 %v304, %v306
    %v308 = vrot.slane %v203, %v307
    %vm309 = vcmask 523712
    %v310 = vsel %vm309, %v308, %v303
    %v311 = vlaneseq
    %v312 = vshrl.u32 %v311, 7
    %v313 = vsub.s32 %v257, %v312
    %v314 = vrot.slane %v204, %v313
    %v315 = vlaneseq
    %v316 = vshrl.u32 %v315, 7
    %v317 = vsub.s32 %v262, %v316
    %v318 = vrot.slane %v205, %v317
    %v319 = vsel %vm267, %v318, %v314
    %v320 = vlaneseq
    %v321 = vshrl.u32 %v320, 7
    %v322 = vsub.s32 %v269, %v321
    %v323 = vrot.slane %v206, %v322
    %v324 = vsel %vm274, %v323, %v319
    %v325 = vlaneseq
    %v326 = vshrl.u32 %v325, 7
    %v327 = vsub.s32 %v276, %v326
    %v328 = vrot.slane %v207, %v327
    %v329 = vsel %vm281, %v328, %v324
    %v330 = vlaneseq
    %v331 = vshrl.u32 %v330, 7
    %v332 = vsub.s32 %v283, %v331
    %v333 = vrot.slane %v208, %v332
    %v334 = vsel %vm288, %v333, %v329
    %v335 = vlaneseq
    %v336 = vshrl.u32 %v335, 7
    %v337 = vsub.s32 %v290, %v336
    %v338 = vrot.slane %v209, %v337
    %v339 = vsel %vm295, %v338, %v334
    %v340 = vlaneseq
    %v341 = vshrl.u32 %v340, 7
    %v342 = vsub.s32 %v297, %v341
    %v343 = vrot.slane %v210, %v342
    %v344 = vsel %vm302, %v343, %v339
    %v345 = vlaneseq
    %v346 = vshrl.u32 %v345, 7
    %v347 = vsub.s32 %v304, %v346
    %v348 = vrot.slane %v211, %v347
    %v349 = vsel %vm309, %v348, %v344
    %vm350 = vcmask 1041409
    %v351 = vsel %vm350, %v349, %v310
    %vm352 = vcmask 523264
    %v354 = vsel %vm352, %v212, 0
    %v357 = vsel %vm352, %v213, 0
    %v360 = vsel %vm352, %v214, 0
    %v363 = vsel %vm352, %v215, 0
    %v365 = vsel %vm352, %v351, 0
    %367 = vmatprep.subr.mxu0 0.0
    %368 = vmatpush1.xpose.msra.mxu0 0.0
    %369 = vmatprep.subr.mxu0 0.0
    %370 = vmatpush1.xpose.msra.mxu0 0.0
    %371 = vmatprep.subr.mxu0 0.0
    %372 = vmatpush1.xpose.msra.mxu0 0.0
    %373 = vmatprep.subr.mxu0 0.0
    %374 = vmatpush1.xpose.msra.mxu0 0.0
    %375 = vmatprep.subr.mxu0 0.0
    %376 = vmatpush1.xpose.msra.mxu0 0.0
    %377 = vmatprep.subr.mxu0 0.0
    %378 = vmatpush1.xpose.msra.mxu0 0.0
    %379 = vmatprep.subr.mxu0 0.0
    %380 = vmatpush1.xpose.msra.mxu0 0.0
    %381 = vmatprep.subr.mxu0 0.0
    %382 = vmatpush1.xpose.msra.mxu0 0.0
    %383 = vmatprep.subr.mxu0 0.0
    %384 = vmatpush1.xpose.msra.mxu0 0.0
    %385 = vmatprep.subr.mxu0 0.0
    %386 = vmatpush1.xpose.msra.mxu0 0.0
    %387 = vmatprep.subr.mxu0 0.0
    %388 = vmatpush1.xpose.msra.mxu0 0.0
    %389 = vmatprep.subr.mxu0 0.0
    %390 = vmatpush1.xpose.msra.mxu0 0.0
    %391 = vmatprep.subr.mxu0 0.0
    %392 = vmatpush1.xpose.msra.mxu0 0.0
    %393 = vmatprep.subr.mxu0 0.0
    %394 = vmatpush1.xpose.msra.mxu0 0.0
    %395 = vmatprep.subr.mxu0 0.0
    %396 = vmatpush1.xpose.msra.mxu0 0.0
    %397 = vmatprep.subr.mxu0 0.0
    %398 = vmatpush1.xpose.msra.mxu0 %v365
    %399 = vmatprep.subr.mxu0 0.0
    %400 = vmatpush2.xpose.msra.mxu0 0.0
    %401 = vmatprep.subr.mxu0 0.0
    %402 = vmatpush2.xpose.msra.mxu0 0.0
    %403 = vmatprep.subr.mxu0 0.0
    %404 = vmatpush2.xpose.msra.mxu0 0.0
    %405 = vmatprep.subr.mxu0 0.0
    %406 = vmatpush2.xpose.msra.mxu0 0.0
    %407 = vmatprep.subr.mxu0 0.0
    %408 = vmatpush2.xpose.msra.mxu0 0.0
    %409 = vmatprep.subr.mxu0 0.0
    %410 = vmatpush2.xpose.msra.mxu0 0.0
    %411 = vmatprep.subr.mxu0 0.0
    %412 = vmatpush2.xpose.msra.mxu0 0.0
    %413 = vmatprep.subr.mxu0 0.0
    %414 = vmatpush2.xpose.msra.mxu0 0.0
    %415 = vmatprep.subr.mxu0 0.0
    %416 = vmatpush2.xpose.msra.mxu0 0.0
    %417 = vmatprep.subr.mxu0 0.0
    %418 = vmatpush2.xpose.msra.mxu0 0.0
    %419 = vmatprep.subr.mxu0 0.0
    %420 = vmatpush2.xpose.msra.mxu0 0.0
    %421 = vmatprep.subr.mxu0 0.0
    %422 = vmatpush2.xpose.msra.mxu0 0.0
    %423 = vmatprep.subr.mxu0 0.0
    %424 = vmatpush2.xpose.msra.mxu0 0.0
    %425 = vmatprep.subr.mxu0 0.0
    %426 = vmatpush2.xpose.msra.mxu0 0.0
    %427 = vmatprep.subr.mxu0 0.0
    %428 = vmatpush2.xpose.msra.mxu0 0.0
    %429 = vmatprep.subr.mxu0 0.0
    %430 = vmatpush2.xpose.msra.mxu0 0.0
    %431 = vmatprep.mubr.f32.mxu0 0.0
    %432 = vmatmul.mubr.f32.gmra.mxu0 %v354
    %v433 = vpop.f32.mrf.mxu0
    %v434 = vadd.f32 %v223, %v433
    %v435 = vpop.f32.mrf.mxu0
    %436 = vmatprep.mubr.f32.mxu0 0.0
    %437 = vmatmul.mubr.f32.gmra.mxu0 %v357
    %v438 = vpop.f32.mrf.mxu0
    %v439 = vadd.f32 %v228, %v438
    %v440 = vpop.f32.mrf.mxu0
    %441 = vmatprep.mubr.f32.mxu0 0.0
    %442 = vmatmul.mubr.f32.gmra.mxu0 %v360
    %v443 = vpop.f32.mrf.mxu0
    %v444 = vadd.f32 %v233, %v443
    %v445 = vpop.f32.mrf.mxu0
    %446 = vmatprep.mubr.f32.mxu0 0.0
    %447 = vmatmul.mubr.f32.gmra.mxu0 %v363
    %v448 = vpop.f32.mrf.mxu0
    %v449 = vadd.f32 %v238, %v448
    %v450 = vpop.f32.mrf.mxu0
    %451 = vdwg.mxu0
    %v452 = vmax.f32 %v434, 0.0
    %v453 = vmax.f32 %v439, 0.0
    %v454 = vmax.f32 %v444, 0.0
    %v455 = vmax.f32 %v449, 0.0
    %v456 = vld [vmem:[%s4] sm:$0xff]
    %v457 = vld [vmem:[%s4 + $0x8] sm:$0xff]
    %v458 = vld [vmem:[%s4 + $0x10] sm:$0xff]
    %v459 = vld [vmem:[%s4 + $0x18] sm:$0xff]
    %v460 = vld [vmem:[%s4 + $0x20] sm:$0xff]
    %v461 = vld [vmem:[%s4 + $0x28] sm:$0xff]
    %v462 = vld [vmem:[%s4 + $0x30] sm:$0xff]
    %v463 = vld [vmem:[%s4 + $0x38] sm:$0xff]
    %v464 = vld [vmem:[%s5] sm:$0xff]
    %v465 = vld [vmem:[%s5 + $0x8] sm:$0xff]
    %v466 = vld [vmem:[%s5 + $0x10] sm:$0xff]
    %v467 = vld [vmem:[%s5 + $0x18] sm:$0xff]
    %v468 = vld [vmem:[%s5 + $0x20] sm:$0xff]
    %v469 = vld [vmem:[%s5 + $0x28] sm:$0xff]
    %v470 = vld [vmem:[%s5 + $0x30] sm:$0xff]
    %v471 = vld [vmem:[%s5 + $0x38] sm:$0xff]
    %473 = vset.pattern.permute.xlu0 0
    %474 = vperm.xlu0 %473, %v464
    %v475 = vpop.permute.xlu0 %474
    %478 = vset.pattern.permute.xlu0 0
    %479 = vperm.xlu0 %478, %v465
    %v480 = vpop.permute.xlu0 %479
    %483 = vset.pattern.permute.xlu0 0
    %484 = vperm.xlu0 %483, %v466
    %v485 = vpop.permute.xlu0 %484
    %488 = vset.pattern.permute.xlu0 0
    %489 = vperm.xlu0 %488, %v467
    %v490 = vpop.permute.xlu0 %489
    %493 = vset.pattern.permute.xlu0 0
    %494 = vperm.xlu0 %493, %v468
    %v495 = vpop.permute.xlu0 %494
    %498 = vset.pattern.permute.xlu0 0
    %499 = vperm.xlu0 %498, %v469
    %v500 = vpop.permute.xlu0 %499
    %503 = vset.pattern.permute.xlu0 0
    %504 = vperm.xlu0 %503, %v470
    %v505 = vpop.permute.xlu0 %504
    %508 = vset.pattern.permute.xlu0 0
    %509 = vperm.xlu0 %508, %v471
    %v510 = vpop.permute.xlu0 %509
    %vm512 = vcmask 261120
    %v514 = vsel %vm512, %v456, 0
    %v517 = vsel %vm512, %v457, 0
    %v520 = vsel %vm512, %v458, 0
    %v523 = vsel %vm512, %v459, 0
    %v526 = vsel %vm512, %v460, 0
    %v529 = vsel %vm512, %v461, 0
    %v532 = vsel %vm512, %v462, 0
    %v535 = vsel %vm512, %v463, 0
    %537 = vmatprep.subr.mxu0 0.0
    %538 = vmatpush1.msra.mxu0 0.0
    %539 = vmatprep.subr.mxu0 0.0
    %540 = vmatpush1.msra.mxu0 0.0
    %541 = vmatprep.subr.mxu0 0.0
    %542 = vmatpush1.msra.mxu0 0.0
    %543 = vmatprep.subr.mxu0 0.0
    %544 = vmatpush1.msra.mxu0 0.0
    %545 = vmatprep.subr.mxu0 0.0
    %546 = vmatpush1.msra.mxu0 0.0
    %547 = vmatprep.subr.mxu0 0.0
    %548 = vmatpush1.msra.mxu0 0.0
    %549 = vmatprep.subr.mxu0 0.0
    %550 = vmatpush1.msra.mxu0 0.0
    %551 = vmatprep.subr.mxu0 0.0
    %552 = vmatpush1.msra.mxu0 0.0
    %553 = vmatprep.subr.mxu0 0.0
    %554 = vmatpush1.msra.mxu0 0.0
    %555 = vmatprep.subr.mxu0 0.0
    %556 = vmatpush1.msra.mxu0 0.0
    %557 = vmatprep.subr.mxu0 0.0
    %558 = vmatpush1.msra.mxu0 0.0
    %559 = vmatprep.subr.mxu0 0.0
    %560 = vmatpush1.msra.mxu0 0.0
    %561 = vmatprep.subr.mxu0 0.0
    %562 = vmatpush1.msra.mxu0 %v455
    %563 = vmatprep.subr.mxu0 0.0
    %564 = vmatpush1.msra.mxu0 %v454
    %565 = vmatprep.subr.mxu0 0.0
    %566 = vmatpush1.msra.mxu0 %v453
    %567 = vmatprep.subr.mxu0 0.0
    %568 = vmatpush1.msra.mxu0 %v452
    %569 = vmatprep.subr.mxu0 0.0
    %570 = vmatpush2.msra.mxu0 0.0
    %571 = vmatprep.subr.mxu0 0.0
    %572 = vmatpush2.msra.mxu0 0.0
    %573 = vmatprep.subr.mxu0 0.0
    %574 = vmatpush2.msra.mxu0 0.0
    %575 = vmatprep.subr.mxu0 0.0
    %576 = vmatpush2.msra.mxu0 0.0
    %577 = vmatprep.subr.mxu0 0.0
    %578 = vmatpush2.msra.mxu0 0.0
    %579 = vmatprep.subr.mxu0 0.0
    %580 = vmatpush2.msra.mxu0 0.0
    %581 = vmatprep.subr.mxu0 0.0
    %582 = vmatpush2.msra.mxu0 0.0
    %583 = vmatprep.subr.mxu0 0.0
    %584 = vmatpush2.msra.mxu0 0.0
    %585 = vmatprep.subr.mxu0 0.0
    %586 = vmatpush2.msra.mxu0 0.0
    %587 = vmatprep.subr.mxu0 0.0
    %588 = vmatpush2.msra.mxu0 0.0
    %589 = vmatprep.subr.mxu0 0.0
    %590 = vmatpush2.msra.mxu0 0.0
    %591 = vmatprep.subr.mxu0 0.0
    %592 = vmatpush2.msra.mxu0 0.0
    %593 = vmatprep.subr.mxu0 0.0
    %594 = vmatpush2.msra.mxu0 0.0
    %595 = vmatprep.subr.mxu0 0.0
    %596 = vmatpush2.msra.mxu0 0.0
    %597 = vmatprep.subr.mxu0 0.0
    %598 = vmatpush2.msra.mxu0 0.0
    %599 = vmatprep.subr.mxu0 0.0
    %600 = vmatpush2.msra.mxu0 0.0
    %601 = vmatprep.mubr.f32.mxu0 0.0
    %602 = vmatmul.mubr.f32.gmra.mxu0 %v514
    %v603 = vpop.f32.mrf.mxu0
    %v604 = vadd.f32 %v475, %v603
    %v605 = vpop.f32.mrf.mxu0
    %606 = vmatprep.mubr.f32.mxu0 0.0
    %607 = vmatmul.mubr.f32.gmra.mxu0 %v517
    %v608 = vpop.f32.mrf.mxu0
    %v609 = vadd.f32 %v480, %v608
    %v610 = vpop.f32.mrf.mxu0
    %611 = vmatprep.mubr.f32.mxu0 0.0
    %612 = vmatmul.mubr.f32.gmra.mxu0 %v520
    %v613 = vpop.f32.mrf.mxu0
    %v614 = vadd.f32 %v485, %v613
    %v615 = vpop.f32.mrf.mxu0
    %616 = vmatprep.mubr.f32.mxu0 0.0
    %617 = vmatmul.mubr.f32.gmra.mxu0 %v523
    %v618 = vpop.f32.mrf.mxu0
    %v619 = vadd.f32 %v490, %v618
    %v620 = vpop.f32.mrf.mxu0
    %621 = vmatprep.mubr.f32.mxu0 0.0
    %622 = vmatmul.mubr.f32.gmra.mxu0 %v526
    %v623 = vpop.f32.mrf.mxu0
    %v624 = vadd.f32 %v495, %v623
    %v625 = vpop.f32.mrf.mxu0
    %626 = vmatprep.mubr.f32.mxu0 0.0
    %627 = vmatmul.mubr.f32.gmra.mxu0 %v529
    %v628 = vpop.f32.mrf.mxu0
    %v629 = vadd.f32 %v500, %v628
    %v630 = vpop.f32.mrf.mxu0
    %631 = vmatprep.mubr.f32.mxu0 0.0
    %632 = vmatmul.mubr.f32.gmra.mxu0 %v532
    %v633 = vpop.f32.mrf.mxu0
    %v634 = vadd.f32 %v505, %v633
    %v635 = vpop.f32.mrf.mxu0
    %636 = vmatprep.mubr.f32.mxu0 0.0
    %637 = vmatmul.mubr.f32.gmra.mxu0 %v535
    %v638 = vpop.f32.mrf.mxu0
    %v639 = vadd.f32 %v510, %v638
    %v640 = vpop.f32.mrf.mxu0
    %641 = vdwg.mxu0
    %v642 = vxor.u32 %v604, 2147483648
    %v643 = vxor.u32 %v609, 2147483648
    %v644 = vxor.u32 %v614, 2147483648
    %v645 = vxor.u32 %v619, 2147483648
    %v646 = vxor.u32 %v624, 2147483648
    %v647 = vxor.u32 %v629, 2147483648
    %v648 = vxor.u32 %v634, 2147483648
    %v649 = vxor.u32 %v639, 2147483648
    %v650 = vmul.f32 %v642, 1.442695
    %v651 = vpow.pop %v650
    %v652 = vmul.f32 %v643, 1.442695
    %v653 = vpow.pop %v652
    %v654 = vmul.f32 %v644, 1.442695
    %v655 = vpow.pop %v654
    %v656 = vmul.f32 %v645, 1.442695
    %v657 = vpow.pop %v656
    %v658 = vmul.f32 %v646, 1.442695
    %v659 = vpow.pop %v658
    %v660 = vmul.f32 %v647, 1.442695
    %v661 = vpow.pop %v660
    %v662 = vmul.f32 %v648, 1.442695
    %v663 = vpow.pop %v662
    %v664 = vmul.f32 %v649, 1.442695
    %v665 = vpow.pop %v664
    %v666 = vadd.f32 %v651, 1.0
    %v667 = vadd.f32 %v653, 1.0
    %v668 = vadd.f32 %v655, 1.0
    %v669 = vadd.f32 %v657, 1.0
    %v670 = vadd.f32 %v659, 1.0
    %v671 = vadd.f32 %v661, 1.0
    %v672 = vadd.f32 %v663, 1.0
    %v673 = vadd.f32 %v665, 1.0
    %v674 = vrcp.pop %v666
    %v675 = vmul.f32 1.0, %v674
    %v676 = vrcp.pop %v667
    %v677 = vmul.f32 1.0, %v676
    %v678 = vrcp.pop %v668
    %v679 = vmul.f32 1.0, %v678
    %v680 = vrcp.pop %v669
    %v681 = vmul.f32 1.0, %v680
    %v682 = vrcp.pop %v670
    %v683 = vmul.f32 1.0, %v682
    %v684 = vrcp.pop %v671
    %v685 = vmul.f32 1.0, %v684
    %v686 = vrcp.pop %v672
    %v687 = vmul.f32 1.0, %v686
    %v688 = vrcp.pop %v673
    %v689 = vmul.f32 1.0, %v688
    %690 = vxpose.xlu0.b32.start [1/16] %v675, 128
    %691 = vxpose.xlu0.b32.cont [2/16] %v677, 128
    %692 = vxpose.xlu0.b32.cont [3/16] %v679, 128
    %693 = vxpose.xlu0.b32.cont [4/16] %v681, 128
    %694 = vxpose.xlu0.b32.cont [5/16] %v683, 128
    %695 = vxpose.xlu0.b32.cont [6/16] %v685, 128
    %696 = vxpose.xlu0.b32.cont [7/16] %v687, 128
    %697 = vxpose.xlu0.b32.cont [8/16] %v689, 128
    %698 = vxpose.xlu0.b32.cont [9/16] 0.0, 128
    %699 = vxpose.xlu0.b32.cont [10/16] 0.0, 128
    %700 = vxpose.xlu0.b32.cont [11/16] 0.0, 128
    %701 = vxpose.xlu0.b32.cont [12/16] 0.0, 128
    %702 = vxpose.xlu0.b32.cont [13/16] 0.0, 128
    %703 = vxpose.xlu0.b32.cont [14/16] 0.0, 128
    %704 = vxpose.xlu0.b32.cont [15/16] 0.0, 128
    %705 = vxpose.xlu0.b32.end [16/16] 0.0, 128
    %v706 = vpop.trf.xlu0
    %v707 = vpop.trf.xlu0
    %v708 = vpop.trf.xlu0
    %v709 = vpop.trf.xlu0
    %v710 = vpop.trf.xlu0
    %v711 = vpop.trf.xlu0
    %v712 = vpop.trf.xlu0
    %v713 = vpop.trf.xlu0
    %v714 = vpop.trf.xlu0
    %v715 = vpop.trf.xlu0
    %v716 = vpop.trf.xlu0
    %v717 = vpop.trf.xlu0
    %v718 = vpop.trf.xlu0
    %v719 = vpop.trf.xlu0
    %v720 = vpop.trf.xlu0
    %v721 = vpop.trf.xlu0
    %v722 = vlaneseq
    %v723 = vshrl.u32 %v722, 7
    %v724 = vsub.s32 0, %v723
    %v725 = vrot.slane %v706, %v724
    %727 = vbcast.lane.b32.xlu0 %v725, 256
    %v728 = vpop.permute.xlu0 %727
    %s730 = sor.u32 256, 8
    %731 = vbcast.lane.b32.xlu0 %v725, %s730
    %v732 = vpop.permute.xlu0 %731
    %s734 = sor.u32 256, 16
    %735 = vbcast.lane.b32.xlu0 %v725, %s734
    %v736 = vpop.permute.xlu0 %735
    %s738 = sor.u32 256, 24
    %739 = vbcast.lane.b32.xlu0 %v725, %s738
    %v740 = vpop.permute.xlu0 %739
    %s742 = sor.u32 256, 32
    %743 = vbcast.lane.b32.xlu0 %v725, %s742
    %v744 = vpop.permute.xlu0 %743
    %s746 = sor.u32 256, 40
    %747 = vbcast.lane.b32.xlu0 %v725, %s746
    %v748 = vpop.permute.xlu0 %747
    %s750 = sor.u32 256, 48
    %751 = vbcast.lane.b32.xlu0 %v725, %s750
    %v752 = vpop.permute.xlu0 %751
    %s754 = sor.u32 256, 56
    %755 = vbcast.lane.b32.xlu0 %v725, %s754
    %v756 = vpop.permute.xlu0 %755
    %v757 = vlaneseq
    %v758 = vshrl.u32 %v757, 7
    %v759 = vsub.s32 1, %v758
    %v760 = vrot.slane %v706, %v759
    %762 = vbcast.lane.b32.xlu0 %v760, 256
    %v763 = vpop.permute.xlu0 %762
    %s765 = sor.u32 256, 8
    %766 = vbcast.lane.b32.xlu0 %v760, %s765
    %v767 = vpop.permute.xlu0 %766
    %s769 = sor.u32 256, 16
    %770 = vbcast.lane.b32.xlu0 %v760, %s769
    %v771 = vpop.permute.xlu0 %770
    %s773 = sor.u32 256, 24
    %774 = vbcast.lane.b32.xlu0 %v760, %s773
    %v775 = vpop.permute.xlu0 %774
    %s777 = sor.u32 256, 32
    %778 = vbcast.lane.b32.xlu0 %v760, %s777
    %v779 = vpop.permute.xlu0 %778
    %s781 = sor.u32 256, 40
    %782 = vbcast.lane.b32.xlu0 %v760, %s781
    %v783 = vpop.permute.xlu0 %782
    %s785 = sor.u32 256, 48
    %786 = vbcast.lane.b32.xlu0 %v760, %s785
    %v787 = vpop.permute.xlu0 %786
    %s789 = sor.u32 256, 56
    %790 = vbcast.lane.b32.xlu0 %v760, %s789
    %v791 = vpop.permute.xlu0 %790
    %v792 = vmul.f32 %v116, %v728
    %v793 = vmul.f32 %v117, %v728
    %v794 = vmul.f32 %v118, %v732
    %v795 = vmul.f32 %v119, %v732
    %v796 = vmul.f32 %v120, %v736
    %v797 = vmul.f32 %v121, %v736
    %v798 = vmul.f32 %v122, %v740
    %v799 = vmul.f32 %v123, %v740
    %v800 = vmul.f32 %v124, %v744
    %v801 = vmul.f32 %v125, %v744
    %v802 = vmul.f32 %v126, %v748
    %v803 = vmul.f32 %v127, %v748
    %v804 = vmul.f32 %v128, %v752
    %v805 = vmul.f32 %v129, %v752
    %v806 = vmul.f32 %v130, %v756
    %v807 = vmul.f32 %v131, %v756
    %v808 = vmul.f32 %v132, %v763
    %v809 = vmul.f32 %v133, %v763
    %v810 = vmul.f32 %v134, %v767
    %v811 = vmul.f32 %v135, %v767
    %v812 = vmul.f32 %v136, %v771
    %v813 = vmul.f32 %v137, %v771
    %v814 = vmul.f32 %v138, %v775
    %v815 = vmul.f32 %v139, %v775
    %v816 = vmul.f32 %v140, %v779
    %v817 = vmul.f32 %v141, %v779
    %v818 = vmul.f32 %v142, %v783
    %v819 = vmul.f32 %v143, %v783
    %v820 = vmul.f32 %v144, %v787
    %v821 = vmul.f32 %v145, %v787
    %v822 = vmul.f32 %v146, %v791
    %v823 = vmul.f32 %v147, %v791
    %824 = vst [vmem:[#allocation7] sm:$0xff] %v792
    %825 = vst [vmem:[#allocation7 + $0x8] sm:$0xff] %v793
    %826 = vst [vmem:[#allocation7 + $0x10] sm:$0xff] %v794
    %827 = vst [vmem:[#allocation7 + $0x18] sm:$0xff] %v795
    %828 = vst [vmem:[#allocation7 + $0x20] sm:$0xff] %v796
    %829 = vst [vmem:[#allocation7 + $0x28] sm:$0xff] %v797
    %830 = vst [vmem:[#allocation7 + $0x30] sm:$0xff] %v798
    %831 = vst [vmem:[#allocation7 + $0x38] sm:$0xff] %v799
    %832 = vst [vmem:[#allocation7 + $0x40] sm:$0xff] %v800
    %833 = vst [vmem:[#allocation7 + $0x48] sm:$0xff] %v801
    %834 = vst [vmem:[#allocation7 + $0x50] sm:$0xff] %v802
    %835 = vst [vmem:[#allocation7 + $0x58] sm:$0xff] %v803
    %836 = vst [vmem:[#allocation7 + $0x60] sm:$0xff] %v804
    %837 = vst [vmem:[#allocation7 + $0x68] sm:$0xff] %v805
    %838 = vst [vmem:[#allocation7 + $0x70] sm:$0xff] %v806
    %839 = vst [vmem:[#allocation7 + $0x78] sm:$0xff] %v807
    %840 = vst [vmem:[#allocation7 + $0x80] sm:$0xff] %v808
    %841 = vst [vmem:[#allocation7 + $0x88] sm:$0xff] %v809
    %842 = vst [vmem:[#allocation7 + $0x90] sm:$0xff] %v810
    %843 = vst [vmem:[#allocation7 + $0x98] sm:$0xff] %v811
    %844 = vst [vmem:[#allocation7 + $0xa0] sm:$0xff] %v812
    %845 = vst [vmem:[#allocation7 + $0xa8] sm:$0xff] %v813
    %846 = vst [vmem:[#allocation7 + $0xb0] sm:$0xff] %v814
    %847 = vst [vmem:[#allocation7 + $0xb8] sm:$0xff] %v815
    %848 = vst [vmem:[#allocation7 + $0xc0] sm:$0xff] %v816
    %849 = vst [vmem:[#allocation7 + $0xc8] sm:$0xff] %v817
    %850 = vst [vmem:[#allocation7 + $0xd0] sm:$0xff] %v818
    %851 = vst [vmem:[#allocation7 + $0xd8] sm:$0xff] %v819
    %852 = vst [vmem:[#allocation7 + $0xe0] sm:$0xff] %v820
    %853 = vst [vmem:[#allocation7 + $0xe8] sm:$0xff] %v821
    %854 = vst [vmem:[#allocation7 + $0xf0] sm:$0xff] %v822
    %855 = vst [vmem:[#allocation7 + $0xf8] sm:$0xff] %v823
    // Predicated region
    $region34: #{tpu_custom_call.1} parent=1 // pred_check
      _
    $region35: #{tpu_custom_call.1} parent=1 // pred_check_branch
      %857 = sbr.rel (0) target = $region37
    $region36: #{tpu_custom_call.1} parent=1 // pred_region
      %s859 = ssub.s32 4096, 4096
      %860 = vsyncadd [#allocation4], %s859
      %s861 = sshll.u32 [#allocation7], 4
      %s862 = int_to_ptr.vmem [resolvable:$true] %s861
      %867 = dma.vmem_to_hbm [thread:$0]  %s862, 4096, %s6, [#allocation4], 256, 256, 16
    $region37: #{tpu_custom_call.1} parent=1 // pred_fallthru
      _
    // Predicated region
    $region38: #{tpu_custom_call.1} parent=1 // pred_check
      _
    $region39: #{tpu_custom_call.1} parent=1 // pred_check_branch
      %869 = sbr.rel (0) target = $region41
    $region40: #{tpu_custom_call.1} parent=1 // pred_region
      %870 = dma.done [#allocation4], 4096
    $region41: #{tpu_custom_call.1} parent=1 // pred_fallthru
      _
    %871 = vsyncpa [#allocation3], 1
    %872 = vsyncpa [#allocation6], 1
    %873 = vsyncpa [#allocation4], 1

</llo_original>
